<compile_context>
chip_gen: v7x
topology: tpu7x:2x2x1
jax: 0.10.0
libtpu: 0.0.40
codegen_flags: <defaults>
</compile_context>

<pallas_src>
import math

import jax
import jax.numpy as jnp
from jax.experimental import pallas as pl
from jax.experimental.pallas import tpu as pltpu

_LANE = 128
_SUBLANE = 8


def _round_up(x, m):
    return ((x + m - 1) // m) * m


# ---------------------------------------------------------------------------
# Activations (match torch defaults). All satisfy act(0) == 0, which keeps the
# zero-padded feature columns exactly zero through the whole stack.
# ---------------------------------------------------------------------------
def _gelu_exact(y):  # torch.nn.GELU(approximate='none')
    return 0.5 * y * (1.0 + jax.lax.erf(y * (1.0 / math.sqrt(2.0))))


_ACTIVATIONS = {
    "relu": lambda y: jnp.maximum(y, 0.0),
    "tanh": jnp.tanh,
    "sigmoid": jax.nn.sigmoid,          # note: sigmoid(0)=0.5; padding still sliced off
    "leaky_relu": lambda y: jnp.where(y >= 0, y, 0.01 * y),
    "elu": lambda y: jnp.where(y > 0, y, jnp.expm1(y)),
    "gelu": _gelu_exact,
    "selu": lambda y: 1.0507009873554805
    * jnp.where(y > 0, y, 1.6732632423543772 * jnp.expm1(y)),
}


# ---------------------------------------------------------------------------
# Kernel: one batch tile, all layers fused, activations stay in VMEM/vregs.
# ---------------------------------------------------------------------------
def _make_fused_mlp_kernel(num_linear, act_name):
    act_fn = _ACTIVATIONS[act_name]

    def kernel(*refs):
        x_ref = refs[0]
        o_ref = refs[-1]
        h = x_ref[...]
        for i in range(num_linear):
            w_ref = refs[1 + 2 * i]   # (K_pad, N_pad)  -- pre-transposed weight
            b_ref = refs[2 + 2 * i]   # (1, N_pad)
            h = jnp.dot(h, w_ref[...], preferred_element_type=jnp.float32)
            h = h + b_ref[...]
            if i < num_linear - 1:    # no activation after the final Linear
                h = act_fn(h)
        o_ref[...] = h.astype(o_ref.dtype)

    return kernel


# ---------------------------------------------------------------------------
# Parameter handling
# ---------------------------------------------------------------------------
def init_mlp_params(key, input_dim, output_dim, hidden_dim, num_layers):
    """Deterministic init mimicking torch.nn.Linear (U(-1/sqrt(fan_in), ...)).

    Returns torch-layout params: list of (W (out, in), b (out,)).
    """
    dims = [input_dim] + [hidden_dim] * num_layers + [output_dim]
    params = []
    for i in range(len(dims) - 1):
        fan_in, fan_out = dims[i], dims[i + 1]
        key, kw, kb = jax.random.split(key, 3)
        bound = 1.0 / math.sqrt(fan_in)
        w = jax.random.uniform(kw, (fan_out, fan_in), jnp.float32, -bound, bound)
        b = jax.random.uniform(kb, (fan_out,), jnp.float32, -bound, bound)
        params.append((w, b))
    return params


def prepare_params(params):
    """One-time: transpose to (in, out) and zero-pad feature dims to 128."""
    prepared = []
    for w, b in params:
        out_f, in_f = w.shape
        in_p = _round_up(in_f, _LANE)
        out_p = _round_up(out_f, _LANE)
        w_t = jnp.zeros((in_p, out_p), w.dtype).at[:in_f, :out_f].set(w.T)
        b2 = jnp.zeros((1, out_p), b.dtype).at[0, :out_f].set(b)
        prepared.append((w_t, b2))
    return prepared


# ---------------------------------------------------------------------------
# Fused forward
# ---------------------------------------------------------------------------
def mlp_forward(x, prepared_params, output_dim, *, activation="gelu"):
    """x: (M, input_dim) f32; prepared_params from prepare_params(). -> (M, output_dim)."""
    M, K = x.shape
    num_linear = len(prepared_params)
    K0_pad = prepared_params[0][0].shape[0]
    N_last_pad = prepared_params[-1][0].shape[1]
    assert K <= K0_pad and output_dim <= N_last_pad

    # Batch tiling: small batches -> single grid step (no launch overhead),
    # large batches -> 256-row tiles, pipelined and "parallel" for megacore.
    tm = 256 if M > 256 else _round_up(max(M, 1), _SUBLANE)
    M_pad = _round_up(M, tm)

    x_pad = jnp.zeros((M_pad, K0_pad), x.dtype).at[:M, :K].set(x)

    in_specs = [pl.BlockSpec((tm, K0_pad), lambda i: (i, 0))]
    flat_args = [x_pad]
    for w_t, b2 in prepared_params:
        kp, np_ = w_t.shape
        in_specs.append(pl.BlockSpec((kp, np_), lambda i: (0, 0)))   # resident
        in_specs.append(pl.BlockSpec((1, np_), lambda i: (0, 0)))    # resident
        flat_args += [w_t, b2]

    # VMEM budget estimate: double-buffered I/O tiles + all resident weights
    # + intermediate activation slabs, with margin. Capped for v7x (64 MiB/TC).
    f32 = 4
    weight_bytes = sum(w.size + b.size for (w, b) in prepared_params) * f32
    max_width = max(w.shape[1] for (w, _) in prepared_params + [(x_pad.T, None)])
    io_bytes = (tm * K0_pad + tm * N_last_pad) * f32
    act_bytes = tm * max_width * f32 * 2
    vmem_bytes = 2 * (weight_bytes + io_bytes) + act_bytes + (4 << 20)
    vmem_bytes = int(min(max(vmem_bytes, 32 << 20), 64 << 20))

    out = pl.pallas_call(
        _make_fused_mlp_kernel(num_linear, activation),
        out_shape=jax.ShapeDtypeStruct((M_pad, N_last_pad), x.dtype),
        grid=(M_pad // tm,),
        in_specs=in_specs,
        out_specs=pl.BlockSpec((tm, N_last_pad), lambda i: (i, 0)),
        compiler_params=pltpu.CompilerParams(
            dimension_semantics=("parallel",),
            vmem_limit_bytes=vmem_bytes,
        ),
    )(*flat_args)

    return out[:M, :output_dim]


# ---------------------------------------------------------------------------
# Pure-JAX reference (matches MLP.forward with torch-layout params)
# ---------------------------------------------------------------------------
def mlp_reference(x, params, *, activation="gelu"):
    act_fn = _ACTIVATIONS[activation]
    n = len(params)
    h = x
    for i, (w, b) in enumerate(params):
        h = h @ w.T + b
        if i < n - 1:
            h = act_fn(h)
    return h


if __name__ == "__main__":
    # Small shapes consistent with the MLP module.
    batch = 8
    input_dim = 32
    hidden_dim = 64
    output_dim = 16
    num_layers = 3          # -> 4 Linear layers total, GELU after all but last
    activation = "gelu"

    key = jax.random.PRNGKey(0)
    key, kx = jax.random.split(key)
    x = jax.random.normal(kx, (batch, input_dim), jnp.float32)

    params = init_mlp_params(key, input_dim, output_dim, hidden_dim, num_layers)
    prepared = prepare_params(params)   # transpose + pad once, outside forward

    out = mlp_forward(x, prepared, output_dim, activation=activation)
    out = jax.block_until_ready(out)

    ref = mlp_reference(x, params, activation=activation)
    assert out.shape == (batch, output_dim)
    assert jnp.allclose(out, ref, atol=2e-5, rtol=2e-5), "mismatch vs reference"

    print("KERNEL_OK")
</pallas_src>

<mosaic_0001>
module attributes {stable_mosaic.version = 11 : i64} {
  func.func @kernel(%arg0: i32, %arg1: memref<8x128xf32, #tpu.memory_space<vmem>>, %arg2: memref<128x128xf32, #tpu.memory_space<vmem>>, %arg3: memref<1x128xf32, #tpu.memory_space<vmem>>, %arg4: memref<128x128xf32, #tpu.memory_space<vmem>>, %arg5: memref<1x128xf32, #tpu.memory_space<vmem>>, %arg6: memref<128x128xf32, #tpu.memory_space<vmem>>, %arg7: memref<1x128xf32, #tpu.memory_space<vmem>>, %arg8: memref<128x128xf32, #tpu.memory_space<vmem>>, %arg9: memref<1x128xf32, #tpu.memory_space<vmem>>, %arg10: memref<8x128xf32, #tpu.memory_space<vmem>>) attributes {dimension_semantics = [#tpu.dimension_semantics<parallel>], iteration_bounds = array<i64: 1>, scalar_prefetch = 0 : i64, scratch_operands = 0 : i64, tpu.core_type = #tpu.core_type<tc>, window_params = [{transform_indices = @transform_0, window_bounds = array<i64: 8, 128>}, {pipeline_mode = #tpu.pipeline_mode<synchronous>, transform_indices = @transform_1, window_bounds = array<i64: 128, 128>}, {pipeline_mode = #tpu.pipeline_mode<synchronous>, transform_indices = @transform_2, window_bounds = array<i64: 1, 128>}, {pipeline_mode = #tpu.pipeline_mode<synchronous>, transform_indices = @transform_3, window_bounds = array<i64: 128, 128>}, {pipeline_mode = #tpu.pipeline_mode<synchronous>, transform_indices = @transform_4, window_bounds = array<i64: 1, 128>}, {pipeline_mode = #tpu.pipeline_mode<synchronous>, transform_indices = @transform_5, window_bounds = array<i64: 128, 128>}, {pipeline_mode = #tpu.pipeline_mode<synchronous>, transform_indices = @transform_6, window_bounds = array<i64: 1, 128>}, {pipeline_mode = #tpu.pipeline_mode<synchronous>, transform_indices = @transform_7, window_bounds = array<i64: 128, 128>}, {pipeline_mode = #tpu.pipeline_mode<synchronous>, transform_indices = @transform_8, window_bounds = array<i64: 1, 128>}, {transform_indices = @transform_9, window_bounds = array<i64: 8, 128>}]} {
    %c0 = arith.constant 0 : index
    %c0_0 = arith.constant 0 : index
    %0 = vector.load %arg1[%c0, %c0_0] : memref<8x128xf32, #tpu.memory_space<vmem>>, vector<8x128xf32>
    %c0_1 = arith.constant 0 : index
    %c0_2 = arith.constant 0 : index
    %1 = vector.load %arg2[%c0_1, %c0_2] : memref<128x128xf32, #tpu.memory_space<vmem>>, vector<128x128xf32>
    %cst = arith.constant dense<0.000000e+00> : vector<8x128xf32>
    %2 = tpu.matmul %0, %1, %cst {dimension_numbers = #tpu.dot_dimension_numbers<[1], [0], [0], [1], [0, 0, 1, 1], [], []>} : vector<8x128xf32>, vector<128x128xf32>, vector<8x128xf32> -> vector<8x128xf32>
    %c0_3 = arith.constant 0 : index
    %c0_4 = arith.constant 0 : index
    %3 = vector.load %arg3[%c0_3, %c0_4] : memref<1x128xf32, #tpu.memory_space<vmem>>, vector<1x128xf32>
    %4 = vector.broadcast %3 : vector<1x128xf32> to vector<8x128xf32>
    %5 = arith.addf %2, %4 : vector<8x128xf32>
    %cst_5 = arith.constant 5.000000e-01 : f32
    %6 = vector.broadcast %cst_5 : f32 to vector<8x128xf32>
    %7 = arith.mulf %6, %5 : vector<8x128xf32>
    %cst_6 = arith.constant 0.707106769 : f32
    %8 = vector.broadcast %cst_6 : f32 to vector<8x128xf32>
    %9 = arith.mulf %5, %8 : vector<8x128xf32>
    %10 = math.erf %9 : vector<8x128xf32>
    %cst_7 = arith.constant 1.000000e+00 : f32
    %11 = vector.broadcast %cst_7 : f32 to vector<8x128xf32>
    %12 = arith.addf %11, %10 : vector<8x128xf32>
    %13 = arith.mulf %7, %12 : vector<8x128xf32>
    %c0_8 = arith.constant 0 : index
    %c0_9 = arith.constant 0 : index
    %14 = vector.load %arg4[%c0_8, %c0_9] : memref<128x128xf32, #tpu.memory_space<vmem>>, vector<128x128xf32>
    %cst_10 = arith.constant dense<0.000000e+00> : vector<8x128xf32>
    %15 = tpu.matmul %13, %14, %cst_10 {dimension_numbers = #tpu.dot_dimension_numbers<[1], [0], [0], [1], [0, 0, 1, 1], [], []>} : vector<8x128xf32>, vector<128x128xf32>, vector<8x128xf32> -> vector<8x128xf32>
    %c0_11 = arith.constant 0 : index
    %c0_12 = arith.constant 0 : index
    %16 = vector.load %arg5[%c0_11, %c0_12] : memref<1x128xf32, #tpu.memory_space<vmem>>, vector<1x128xf32>
    %17 = vector.broadcast %16 : vector<1x128xf32> to vector<8x128xf32>
    %18 = arith.addf %15, %17 : vector<8x128xf32>
    %cst_13 = arith.constant 5.000000e-01 : f32
    %19 = vector.broadcast %cst_13 : f32 to vector<8x128xf32>
    %20 = arith.mulf %19, %18 : vector<8x128xf32>
    %cst_14 = arith.constant 0.707106769 : f32
    %21 = vector.broadcast %cst_14 : f32 to vector<8x128xf32>
    %22 = arith.mulf %18, %21 : vector<8x128xf32>
    %23 = math.erf %22 : vector<8x128xf32>
    %cst_15 = arith.constant 1.000000e+00 : f32
    %24 = vector.broadcast %cst_15 : f32 to vector<8x128xf32>
    %25 = arith.addf %24, %23 : vector<8x128xf32>
    %26 = arith.mulf %20, %25 : vector<8x128xf32>
    %c0_16 = arith.constant 0 : index
    %c0_17 = arith.constant 0 : index
    %27 = vector.load %arg6[%c0_16, %c0_17] : memref<128x128xf32, #tpu.memory_space<vmem>>, vector<128x128xf32>
    %cst_18 = arith.constant dense<0.000000e+00> : vector<8x128xf32>
    %28 = tpu.matmul %26, %27, %cst_18 {dimension_numbers = #tpu.dot_dimension_numbers<[1], [0], [0], [1], [0, 0, 1, 1], [], []>} : vector<8x128xf32>, vector<128x128xf32>, vector<8x128xf32> -> vector<8x128xf32>
    %c0_19 = arith.constant 0 : index
    %c0_20 = arith.constant 0 : index
    %29 = vector.load %arg7[%c0_19, %c0_20] : memref<1x128xf32, #tpu.memory_space<vmem>>, vector<1x128xf32>
    %30 = vector.broadcast %29 : vector<1x128xf32> to vector<8x128xf32>
    %31 = arith.addf %28, %30 : vector<8x128xf32>
    %cst_21 = arith.constant 5.000000e-01 : f32
    %32 = vector.broadcast %cst_21 : f32 to vector<8x128xf32>
    %33 = arith.mulf %32, %31 : vector<8x128xf32>
    %cst_22 = arith.constant 0.707106769 : f32
    %34 = vector.broadcast %cst_22 : f32 to vector<8x128xf32>
    %35 = arith.mulf %31, %34 : vector<8x128xf32>
    %36 = math.erf %35 : vector<8x128xf32>
    %cst_23 = arith.constant 1.000000e+00 : f32
    %37 = vector.broadcast %cst_23 : f32 to vector<8x128xf32>
    %38 = arith.addf %37, %36 : vector<8x128xf32>
    %39 = arith.mulf %33, %38 : vector<8x128xf32>
    %c0_24 = arith.constant 0 : index
    %c0_25 = arith.constant 0 : index
    %40 = vector.load %arg8[%c0_24, %c0_25] : memref<128x128xf32, #tpu.memory_space<vmem>>, vector<128x128xf32>
    %cst_26 = arith.constant dense<0.000000e+00> : vector<8x128xf32>
    %41 = tpu.matmul %39, %40, %cst_26 {dimension_numbers = #tpu.dot_dimension_numbers<[1], [0], [0], [1], [0, 0, 1, 1], [], []>} : vector<8x128xf32>, vector<128x128xf32>, vector<8x128xf32> -> vector<8x128xf32>
    %c0_27 = arith.constant 0 : index
    %c0_28 = arith.constant 0 : index
    %42 = vector.load %arg9[%c0_27, %c0_28] : memref<1x128xf32, #tpu.memory_space<vmem>>, vector<1x128xf32>
    %43 = vector.broadcast %42 : vector<1x128xf32> to vector<8x128xf32>
    %44 = arith.addf %41, %43 : vector<8x128xf32>
    %c0_29 = arith.constant 0 : index
    %c0_30 = arith.constant 0 : index
    %45 = vector.load %arg10[%c0_29, %c0_30] : memref<8x128xf32, #tpu.memory_space<vmem>>, vector<8x128xf32>
    tpu.vector_store %arg10[%c0_29, %c0_30], %44 {strides = array<i32>} : memref<8x128xf32, #tpu.memory_space<vmem>>, vector<8x128xf32>,
    return
  }
  func.func @transform_0(%arg0: i32) -> (i32, i32) {
    %c0_i32 = arith.constant 0 : i32
    %c0_i32_0 = arith.constant 0 : i32
    return %arg0, %c0_i32 : i32, i32
  }
  func.func @transform_1(%arg0: i32) -> (i32, i32) {
    %c0_i32 = arith.constant 0 : i32
    %c0_i32_0 = arith.constant 0 : i32
    %c0_i32_1 = arith.constant 0 : i32
    return %c0_i32, %c0_i32_0 : i32, i32
  }
  func.func @transform_2(%arg0: i32) -> (i32, i32) {
    %c0_i32 = arith.constant 0 : i32
    %c0_i32_0 = arith.constant 0 : i32
    %c0_i32_1 = arith.constant 0 : i32
    return %c0_i32, %c0_i32_0 : i32, i32
  }
  func.func @transform_3(%arg0: i32) -> (i32, i32) {
    %c0_i32 = arith.constant 0 : i32
    %c0_i32_0 = arith.constant 0 : i32
    %c0_i32_1 = arith.constant 0 : i32
    return %c0_i32, %c0_i32_0 : i32, i32
  }
  func.func @transform_4(%arg0: i32) -> (i32, i32) {
    %c0_i32 = arith.constant 0 : i32
    %c0_i32_0 = arith.constant 0 : i32
    %c0_i32_1 = arith.constant 0 : i32
    return %c0_i32, %c0_i32_0 : i32, i32
  }
  func.func @transform_5(%arg0: i32) -> (i32, i32) {
    %c0_i32 = arith.constant 0 : i32
    %c0_i32_0 = arith.constant 0 : i32
    %c0_i32_1 = arith.constant 0 : i32
    return %c0_i32, %c0_i32_0 : i32, i32
  }
  func.func @transform_6(%arg0: i32) -> (i32, i32) {
    %c0_i32 = arith.constant 0 : i32
    %c0_i32_0 = arith.constant 0 : i32
    %c0_i32_1 = arith.constant 0 : i32
    return %c0_i32, %c0_i32_0 : i32, i32
  }
  func.func @transform_7(%arg0: i32) -> (i32, i32) {
    %c0_i32 = arith.constant 0 : i32
    %c0_i32_0 = arith.constant 0 : i32
    %c0_i32_1 = arith.constant 0 : i32
    return %c0_i32, %c0_i32_0 : i32, i32
  }
  func.func @transform_8(%arg0: i32) -> (i32, i32) {
    %c0_i32 = arith.constant 0 : i32
    %c0_i32_0 = arith.constant 0 : i32
    %c0_i32_1 = arith.constant 0 : i32
    return %c0_i32, %c0_i32_0 : i32, i32
  }
  func.func @transform_9(%arg0: i32) -> (i32, i32) {
    %c0_i32 = arith.constant 0 : i32
    %c0_i32_0 = arith.constant 0 : i32
    return %arg0, %c0_i32 : i32, i32
  }
}

</mosaic_0001>

<llo_original>
// kernel: tpu_custom_call.1
$region0: #{tpu_custom_call.1}
  #allocation0 [shape = 'u32[]', space=smem, size = 0x4, offset = 0x4, fixed_abs, tag = 'smem constant byte address 0x4 - core index']
  #allocation1 [shape = 'u32[144,128]{1,0:T(1,128)}', space=vmem, size = 0x12000, scoped, tag = 'internal scratch']
  %s0 = inlined_call_operand.hbm [shape: f32[8,128], index: 0, kind: input, shape index: {}]
  %s1 = inlined_call_operand.hbm [shape: f32[128,128], index: 1, kind: input, shape index: {}]
  %s2 = inlined_call_operand.vmem [shape: f32[1,128], index: 2, kind: input, shape index: {}]
  %s3 = inlined_call_operand.hbm [shape: f32[128,128], index: 3, kind: input, shape index: {}]
  %s4 = inlined_call_operand.vmem [shape: f32[1,128], index: 4, kind: input, shape index: {}]
  %s5 = inlined_call_operand.hbm [shape: f32[128,128], index: 5, kind: input, shape index: {}]
  %s6 = inlined_call_operand.vmem [shape: f32[1,128], index: 6, kind: input, shape index: {}]
  %s7 = inlined_call_operand.hbm [shape: f32[128,128], index: 7, kind: input, shape index: {}]
  %s8 = inlined_call_operand.vmem [shape: f32[1,128], index: 8, kind: input, shape index: {}]
  %s9 = inlined_call_operand.hbm [shape: f32[8,128], index: 9, kind: output, shape index: {}]
  %s10 = sld [smem:[#allocation0]]
  $region66: #{tpu_custom_call.1} parent=0
    _
  %s12 = ssub.s32 1, %s10
  %s13 = scalar_select 0, %s12, %s10
  $region1: #{tpu_custom_call.1} parent=0
    #allocation2 [shape = 'u8[4096]{0}', space=vmem, size = 0x1000, scoped, tag = 'input window, operand 0, single buffered']
    #allocation3 [shape = 's32[1]{0}', space=sflag, size = 0x4, scoped, tag = 'scoped memory for tpu_custom_call.1']
    #allocation4 [shape = 's32[1]{0}', space=sflag, size = 0x4, scoped, tag = 'scoped memory for tpu_custom_call.1']
    #allocation5 [shape = 'u8[65536]{0}', space=vmem, size = 0x10000, scoped, tag = 'input window, operand 1, single buffered']
    #allocation6 [shape = 's32[1]{0}', space=sflag, size = 0x4, scoped, tag = 'scoped memory for tpu_custom_call.1']
    #allocation7 [shape = 'u8[65536]{0}', space=vmem, size = 0x10000, scoped, tag = 'input window, operand 3, single buffered']
    #allocation8 [shape = 'u8[65536]{0}', space=vmem, size = 0x10000, scoped, tag = 'input window, operand 5, single buffered']
    #allocation9 [shape = 's32[1]{0}', space=sflag, size = 0x4, scoped, tag = 'scoped memory for tpu_custom_call.1']
    #allocation10 [shape = 'u8[65536]{0}', space=vmem, size = 0x10000, scoped, tag = 'input window, operand 7, single buffered']
    #allocation11 [shape = 'u8[4096]{0}', space=vmem, size = 0x1000, scoped, tag = 'output window, operand 0, single buffered']
    %14 = vsyncpa [#allocation3], 0
    %15 = vsyncpa [#allocation6], 0
    %16 = vsyncpa [#allocation9], 0
    %17 = vsyncpa [#allocation4], 0
    // Predicated region
    $region2: #{tpu_custom_call.1} parent=1 // pred_check
      _
    $region3: #{tpu_custom_call.1} parent=1 // pred_check_branch
      %19 = sbr.rel (0) target = $region5
    $region4: #{tpu_custom_call.1} parent=1 // pred_region
      %s21 = ssub.s32 128, 128
      %22 = vsyncadd [#allocation3], %s21
      %s24 = sshll.u32 [#allocation2], 4
      %s25 = int_to_ptr.vmem [resolvable:$true] %s24
      %27 = dma.hbm_to_vmem [thread:$0]  %s0, 128, %s25, [#allocation3]
    $region5: #{tpu_custom_call.1} parent=1 // pred_fallthru
      _
    // Predicated region
    $region6: #{tpu_custom_call.1} parent=1 // pred_check
      _
    $region7: #{tpu_custom_call.1} parent=1 // pred_check_branch
      %29 = sbr.rel (0) target = $region9
    $region8: #{tpu_custom_call.1} parent=1 // pred_region
      %s31 = ssub.s32 2048, 2048
      %32 = vsyncadd [#allocation6], %s31
      %s33 = sshll.u32 [#allocation5], 4
      %s34 = int_to_ptr.vmem [resolvable:$true] %s33
      %39 = dma.hbm_to_vmem [thread:$0]  %s1, 2048, %s34, [#allocation6], 128, 128, 8
    $region9: #{tpu_custom_call.1} parent=1 // pred_fallthru
      _
    // Predicated region
    $region10: #{tpu_custom_call.1} parent=1 // pred_check
      _
    $region11: #{tpu_custom_call.1} parent=1 // pred_check_branch
      %41 = sbr.rel (0) target = $region13
    $region12: #{tpu_custom_call.1} parent=1 // pred_region
      _
    $region13: #{tpu_custom_call.1} parent=1 // pred_fallthru
      _
    // Predicated region
    $region14: #{tpu_custom_call.1} parent=1 // pred_check
      _
    $region15: #{tpu_custom_call.1} parent=1 // pred_check_branch
      %43 = sbr.rel (0) target = $region17
    $region16: #{tpu_custom_call.1} parent=1 // pred_region
      %s45 = ssub.s32 2048, 2048
      %46 = vsyncadd [#allocation6], %s45
      %s47 = sshll.u32 [#allocation7], 4
      %s48 = int_to_ptr.vmem [resolvable:$true] %s47
      %53 = dma.hbm_to_vmem [thread:$0]  %s3, 2048, %s48, [#allocation6], 128, 128, 8
    $region17: #{tpu_custom_call.1} parent=1 // pred_fallthru
      _
    // Predicated region
    $region18: #{tpu_custom_call.1} parent=1 // pred_check
      _
    $region19: #{tpu_custom_call.1} parent=1 // pred_check_branch
      %55 = sbr.rel (0) target = $region21
    $region20: #{tpu_custom_call.1} parent=1 // pred_region
      _
    $region21: #{tpu_custom_call.1} parent=1 // pred_fallthru
      _
    // Predicated region
    $region22: #{tpu_custom_call.1} parent=1 // pred_check
      _
    $region23: #{tpu_custom_call.1} parent=1 // pred_check_branch
      %57 = sbr.rel (0) target = $region25
    $region24: #{tpu_custom_call.1} parent=1 // pred_region
      %s59 = ssub.s32 2048, 2048
      %60 = vsyncadd [#allocation9], %s59
      %s61 = sshll.u32 [#allocation8], 4
      %s62 = int_to_ptr.vmem [resolvable:$true] %s61
      %67 = dma.hbm_to_vmem [thread:$0]  %s5, 2048, %s62, [#allocation9], 128, 128, 8
    $region25: #{tpu_custom_call.1} parent=1 // pred_fallthru
      _
    // Predicated region
    $region26: #{tpu_custom_call.1} parent=1 // pred_check
      _
    $region27: #{tpu_custom_call.1} parent=1 // pred_check_branch
      %69 = sbr.rel (0) target = $region29
    $region28: #{tpu_custom_call.1} parent=1 // pred_region
      _
    $region29: #{tpu_custom_call.1} parent=1 // pred_fallthru
      _
    // Predicated region
    $region30: #{tpu_custom_call.1} parent=1 // pred_check
      _
    $region31: #{tpu_custom_call.1} parent=1 // pred_check_branch
      %71 = sbr.rel (0) target = $region33
    $region32: #{tpu_custom_call.1} parent=1 // pred_region
      %s73 = ssub.s32 2048, 2048
      %74 = vsyncadd [#allocation9], %s73
      %s75 = sshll.u32 [#allocation10], 4
      %s76 = int_to_ptr.vmem [resolvable:$true] %s75
      %81 = dma.hbm_to_vmem [thread:$0]  %s7, 2048, %s76, [#allocation9], 128, 128, 8
    $region33: #{tpu_custom_call.1} parent=1 // pred_fallthru
      _
    // Predicated region
    $region34: #{tpu_custom_call.1} parent=1 // pred_check
      _
    $region35: #{tpu_custom_call.1} parent=1 // pred_check_branch
      %83 = sbr.rel (0) target = $region37
    $region36: #{tpu_custom_call.1} parent=1 // pred_region
      _
    $region37: #{tpu_custom_call.1} parent=1 // pred_fallthru
      _
    // Predicated region
    $region38: #{tpu_custom_call.1} parent=1 // pred_check
      _
    $region39: #{tpu_custom_call.1} parent=1 // pred_check_branch
      %85 = sbr.rel (0) target = $region41
    $region40: #{tpu_custom_call.1} parent=1 // pred_region
      %86 = dma.done [#allocation3], 128
    $region41: #{tpu_custom_call.1} parent=1 // pred_fallthru
      _
    // Predicated region
    $region42: #{tpu_custom_call.1} parent=1 // pred_check
      _
    $region43: #{tpu_custom_call.1} parent=1 // pred_check_branch
      %88 = sbr.rel (0) target = $region45
    $region44: #{tpu_custom_call.1} parent=1 // pred_region
      %89 = dma.done [#allocation6], 2048
    $region45: #{tpu_custom_call.1} parent=1 // pred_fallthru
      _
    // Predicated region
    $region46: #{tpu_custom_call.1} parent=1 // pred_check
      _
    $region47: #{tpu_custom_call.1} parent=1 // pred_check_branch
      %91 = sbr.rel (0) target = $region49
    $region48: #{tpu_custom_call.1} parent=1 // pred_region
      %92 = dma.done [#allocation6], 2048
    $region49: #{tpu_custom_call.1} parent=1 // pred_fallthru
      _
    // Predicated region
    $region50: #{tpu_custom_call.1} parent=1 // pred_check
      _
    $region51: #{tpu_custom_call.1} parent=1 // pred_check_branch
      %94 = sbr.rel (0) target = $region53
    $region52: #{tpu_custom_call.1} parent=1 // pred_region
      %95 = dma.done [#allocation9], 2048
    $region53: #{tpu_custom_call.1} parent=1 // pred_fallthru
      _
    // Predicated region
    $region54: #{tpu_custom_call.1} parent=1 // pred_check
      _
    $region55: #{tpu_custom_call.1} parent=1 // pred_check_branch
      %97 = sbr.rel (0) target = $region57
    $region56: #{tpu_custom_call.1} parent=1 // pred_region
      %98 = dma.done [#allocation9], 2048
    $region57: #{tpu_custom_call.1} parent=1 // pred_fallthru
      _
    %v99 = vld [vmem:[#allocation2] sm:$0xff]
    %v100 = vld [vmem:[#allocation5] sm:$0xff]
    %v101 = vld [vmem:[#allocation5 + $0x8] sm:$0xff]
    %v102 = vld [vmem:[#allocation5 + $0x10] sm:$0xff]
    %v103 = vld [vmem:[#allocation5 + $0x18] sm:$0xff]
    %v104 = vld [vmem:[#allocation5 + $0x20] sm:$0xff]
    %v105 = vld [vmem:[#allocation5 + $0x28] sm:$0xff]
    %v106 = vld [vmem:[#allocation5 + $0x30] sm:$0xff]
    %v107 = vld [vmem:[#allocation5 + $0x38] sm:$0xff]
    %v108 = vld [vmem:[#allocation5 + $0x40] sm:$0xff]
    %v109 = vld [vmem:[#allocation5 + $0x48] sm:$0xff]
    %v110 = vld [vmem:[#allocation5 + $0x50] sm:$0xff]
    %v111 = vld [vmem:[#allocation5 + $0x58] sm:$0xff]
    %v112 = vld [vmem:[#allocation5 + $0x60] sm:$0xff]
    %v113 = vld [vmem:[#allocation5 + $0x68] sm:$0xff]
    %v114 = vld [vmem:[#allocation5 + $0x70] sm:$0xff]
    %v115 = vld [vmem:[#allocation5 + $0x78] sm:$0xff]
    %v116 = vld [vmem:[%s2] sm:$0x1]
    %v118 = vlaneseq
    %v119 = vshrl.u32 %v118, 7
    %v120 = vsub.s32 0, %v119
    %v121 = vrot.slane %v116, %v120
    %123 = vmatprep.subr.mxu0 0.0
    %124 = vmatpush1.msra.mxu0 %v100
    %125 = vmatprep.subr.mxu0 0.0
    %126 = vmatpush1.msra.mxu0 %v101
    %127 = vmatprep.subr.mxu0 0.0
    %128 = vmatpush1.msra.mxu0 %v102
    %129 = vmatprep.subr.mxu0 0.0
    %130 = vmatpush1.msra.mxu0 %v103
    %131 = vmatprep.subr.mxu0 0.0
    %132 = vmatpush1.msra.mxu0 %v104
    %133 = vmatprep.subr.mxu0 0.0
    %134 = vmatpush1.msra.mxu0 %v105
    %135 = vmatprep.subr.mxu0 0.0
    %136 = vmatpush1.msra.mxu0 %v106
    %137 = vmatprep.subr.mxu0 0.0
    %138 = vmatpush1.msra.mxu0 %v107
    %139 = vmatprep.subr.mxu0 0.0
    %140 = vmatpush1.msra.mxu0 %v108
    %141 = vmatprep.subr.mxu0 0.0
    %142 = vmatpush1.msra.mxu0 %v109
    %143 = vmatprep.subr.mxu0 0.0
    %144 = vmatpush1.msra.mxu0 %v110
    %145 = vmatprep.subr.mxu0 0.0
    %146 = vmatpush1.msra.mxu0 %v111
    %147 = vmatprep.subr.mxu0 0.0
    %148 = vmatpush1.msra.mxu0 %v112
    %149 = vmatprep.subr.mxu0 0.0
    %150 = vmatpush1.msra.mxu0 %v113
    %151 = vmatprep.subr.mxu0 0.0
    %152 = vmatpush1.msra.mxu0 %v114
    %153 = vmatprep.subr.mxu0 0.0
    %154 = vmatpush1.msra.mxu0 %v115
    %155 = vmatprep.subr.mxu0 0.0
    %156 = vmatpush1.msra.mxu0 0.0
    %157 = vmatprep.subr.mxu0 0.0
    %158 = vmatpush1.msra.mxu0 0.0
    %159 = vmatprep.subr.mxu0 0.0
    %160 = vmatpush1.msra.mxu0 0.0
    %161 = vmatprep.subr.mxu0 0.0
    %162 = vmatpush1.msra.mxu0 0.0
    %163 = vmatprep.subr.mxu0 0.0
    %164 = vmatpush1.msra.mxu0 0.0
    %165 = vmatprep.subr.mxu0 0.0
    %166 = vmatpush1.msra.mxu0 0.0
    %167 = vmatprep.subr.mxu0 0.0
    %168 = vmatpush1.msra.mxu0 0.0
    %169 = vmatprep.subr.mxu0 0.0
    %170 = vmatpush1.msra.mxu0 0.0
    %171 = vmatprep.subr.mxu0 0.0
    %172 = vmatpush1.msra.mxu0 0.0
    %173 = vmatprep.subr.mxu0 0.0
    %174 = vmatpush1.msra.mxu0 0.0
    %175 = vmatprep.subr.mxu0 0.0
    %176 = vmatpush1.msra.mxu0 0.0
    %177 = vmatprep.subr.mxu0 0.0
    %178 = vmatpush1.msra.mxu0 0.0
    %179 = vmatprep.subr.mxu0 0.0
    %180 = vmatpush1.msra.mxu0 0.0
    %181 = vmatprep.subr.mxu0 0.0
    %182 = vmatpush1.msra.mxu0 0.0
    %183 = vmatprep.subr.mxu0 0.0
    %184 = vmatpush1.msra.mxu0 0.0
    %185 = vmatprep.subr.mxu0 0.0
    %186 = vmatpush1.msra.mxu0 0.0
    %187 = vmatprep.mubr.f32.mxu0 0.0
    %188 = vmatmul.mubr.f32.gmra.mrb[0].mxu0 %v99
    %v189 = vpop.f32.mrb[0].mxu0
    %v190 = vadd.f32 %v121, %v189
    %v191 = vpop.f32.mrb[0].mxu0
    %192 = vdwg.mxu0
    %v193 = vmul.f32 %v190, 0.5
    %v194 = vmul.f32 %v190, 0.70710677
    %v195 = verf.f32.pop %v194
    %v196 = vadd.f32 %v195, 1.0
    %v197 = vmul.f32 %v193, %v196
    %v198 = vld [vmem:[#allocation7] sm:$0xff]
    %v199 = vld [vmem:[#allocation7 + $0x8] sm:$0xff]
    %v200 = vld [vmem:[#allocation7 + $0x10] sm:$0xff]
    %v201 = vld [vmem:[#allocation7 + $0x18] sm:$0xff]
    %v202 = vld [vmem:[#allocation7 + $0x20] sm:$0xff]
    %v203 = vld [vmem:[#allocation7 + $0x28] sm:$0xff]
    %v204 = vld [vmem:[#allocation7 + $0x30] sm:$0xff]
    %v205 = vld [vmem:[#allocation7 + $0x38] sm:$0xff]
    %v206 = vld [vmem:[#allocation7 + $0x40] sm:$0xff]
    %v207 = vld [vmem:[#allocation7 + $0x48] sm:$0xff]
    %v208 = vld [vmem:[#allocation7 + $0x50] sm:$0xff]
    %v209 = vld [vmem:[#allocation7 + $0x58] sm:$0xff]
    %v210 = vld [vmem:[#allocation7 + $0x60] sm:$0xff]
    %v211 = vld [vmem:[#allocation7 + $0x68] sm:$0xff]
    %v212 = vld [vmem:[#allocation7 + $0x70] sm:$0xff]
    %v213 = vld [vmem:[#allocation7 + $0x78] sm:$0xff]
    %v214 = vld [vmem:[%s4] sm:$0x1]
    %v216 = vlaneseq
    %v217 = vshrl.u32 %v216, 7
    %v218 = vsub.s32 0, %v217
    %v219 = vrot.slane %v214, %v218
    %221 = vmatprep.subr.mxu0 0.0
    %222 = vmatpush1.msra.mxu0 %v198
    %223 = vmatprep.subr.mxu0 0.0
    %224 = vmatpush1.msra.mxu0 %v199
    %225 = vmatprep.subr.mxu0 0.0
    %226 = vmatpush1.msra.mxu0 %v200
    %227 = vmatprep.subr.mxu0 0.0
    %228 = vmatpush1.msra.mxu0 %v201
    %229 = vmatprep.subr.mxu0 0.0
    %230 = vmatpush1.msra.mxu0 %v202
    %231 = vmatprep.subr.mxu0 0.0
    %232 = vmatpush1.msra.mxu0 %v203
    %233 = vmatprep.subr.mxu0 0.0
    %234 = vmatpush1.msra.mxu0 %v204
    %235 = vmatprep.subr.mxu0 0.0
    %236 = vmatpush1.msra.mxu0 %v205
    %237 = vmatprep.subr.mxu0 0.0
    %238 = vmatpush1.msra.mxu0 %v206
    %239 = vmatprep.subr.mxu0 0.0
    %240 = vmatpush1.msra.mxu0 %v207
    %241 = vmatprep.subr.mxu0 0.0
    %242 = vmatpush1.msra.mxu0 %v208
    %243 = vmatprep.subr.mxu0 0.0
    %244 = vmatpush1.msra.mxu0 %v209
    %245 = vmatprep.subr.mxu0 0.0
    %246 = vmatpush1.msra.mxu0 %v210
    %247 = vmatprep.subr.mxu0 0.0
    %248 = vmatpush1.msra.mxu0 %v211
    %249 = vmatprep.subr.mxu0 0.0
    %250 = vmatpush1.msra.mxu0 %v212
    %251 = vmatprep.subr.mxu0 0.0
    %252 = vmatpush1.msra.mxu0 %v213
    %253 = vmatprep.subr.mxu0 0.0
    %254 = vmatpush1.msra.mxu0 0.0
    %255 = vmatprep.subr.mxu0 0.0
    %256 = vmatpush1.msra.mxu0 0.0
    %257 = vmatprep.subr.mxu0 0.0
    %258 = vmatpush1.msra.mxu0 0.0
    %259 = vmatprep.subr.mxu0 0.0
    %260 = vmatpush1.msra.mxu0 0.0
    %261 = vmatprep.subr.mxu0 0.0
    %262 = vmatpush1.msra.mxu0 0.0
    %263 = vmatprep.subr.mxu0 0.0
    %264 = vmatpush1.msra.mxu0 0.0
    %265 = vmatprep.subr.mxu0 0.0
    %266 = vmatpush1.msra.mxu0 0.0
    %267 = vmatprep.subr.mxu0 0.0
    %268 = vmatpush1.msra.mxu0 0.0
    %269 = vmatprep.subr.mxu0 0.0
    %270 = vmatpush1.msra.mxu0 0.0
    %271 = vmatprep.subr.mxu0 0.0
    %272 = vmatpush1.msra.mxu0 0.0
    %273 = vmatprep.subr.mxu0 0.0
    %274 = vmatpush1.msra.mxu0 0.0
    %275 = vmatprep.subr.mxu0 0.0
    %276 = vmatpush1.msra.mxu0 0.0
    %277 = vmatprep.subr.mxu0 0.0
    %278 = vmatpush1.msra.mxu0 0.0
    %279 = vmatprep.subr.mxu0 0.0
    %280 = vmatpush1.msra.mxu0 0.0
    %281 = vmatprep.subr.mxu0 0.0
    %282 = vmatpush1.msra.mxu0 0.0
    %283 = vmatprep.subr.mxu0 0.0
    %284 = vmatpush1.msra.mxu0 0.0
    %285 = vmatprep.mubr.f32.mxu0 0.0
    %286 = vmatmul.mubr.f32.gmra.mrb[0].mxu0 %v197
    %v287 = vpop.f32.mrb[0].mxu0
    %v288 = vadd.f32 %v219, %v287
    %v289 = vpop.f32.mrb[0].mxu0
    %290 = vdwg.mxu0
    %v291 = vmul.f32 %v288, 0.5
    %v292 = vmul.f32 %v288, 0.70710677
    %v293 = verf.f32.pop %v292
    %v294 = vadd.f32 %v293, 1.0
    %v295 = vmul.f32 %v291, %v294
    %v296 = vld [vmem:[#allocation8] sm:$0xff]
    %v297 = vld [vmem:[#allocation8 + $0x8] sm:$0xff]
    %v298 = vld [vmem:[#allocation8 + $0x10] sm:$0xff]
    %v299 = vld [vmem:[#allocation8 + $0x18] sm:$0xff]
    %v300 = vld [vmem:[#allocation8 + $0x20] sm:$0xff]
    %v301 = vld [vmem:[#allocation8 + $0x28] sm:$0xff]
    %v302 = vld [vmem:[#allocation8 + $0x30] sm:$0xff]
    %v303 = vld [vmem:[#allocation8 + $0x38] sm:$0xff]
    %v304 = vld [vmem:[#allocation8 + $0x40] sm:$0xff]
    %v305 = vld [vmem:[#allocation8 + $0x48] sm:$0xff]
    %v306 = vld [vmem:[#allocation8 + $0x50] sm:$0xff]
    %v307 = vld [vmem:[#allocation8 + $0x58] sm:$0xff]
    %v308 = vld [vmem:[#allocation8 + $0x60] sm:$0xff]
    %v309 = vld [vmem:[#allocation8 + $0x68] sm:$0xff]
    %v310 = vld [vmem:[#allocation8 + $0x70] sm:$0xff]
    %v311 = vld [vmem:[#allocation8 + $0x78] sm:$0xff]
    %v312 = vld [vmem:[%s6] sm:$0x1]
    %v314 = vlaneseq
    %v315 = vshrl.u32 %v314, 7
    %v316 = vsub.s32 0, %v315
    %v317 = vrot.slane %v312, %v316
    %319 = vmatprep.subr.mxu0 0.0
    %320 = vmatpush1.msra.mxu0 %v296
    %321 = vmatprep.subr.mxu0 0.0
    %322 = vmatpush1.msra.mxu0 %v297
    %323 = vmatprep.subr.mxu0 0.0
    %324 = vmatpush1.msra.mxu0 %v298
    %325 = vmatprep.subr.mxu0 0.0
    %326 = vmatpush1.msra.mxu0 %v299
    %327 = vmatprep.subr.mxu0 0.0
    %328 = vmatpush1.msra.mxu0 %v300
    %329 = vmatprep.subr.mxu0 0.0
    %330 = vmatpush1.msra.mxu0 %v301
    %331 = vmatprep.subr.mxu0 0.0
    %332 = vmatpush1.msra.mxu0 %v302
    %333 = vmatprep.subr.mxu0 0.0
    %334 = vmatpush1.msra.mxu0 %v303
    %335 = vmatprep.subr.mxu0 0.0
    %336 = vmatpush1.msra.mxu0 %v304
    %337 = vmatprep.subr.mxu0 0.0
    %338 = vmatpush1.msra.mxu0 %v305
    %339 = vmatprep.subr.mxu0 0.0
    %340 = vmatpush1.msra.mxu0 %v306
    %341 = vmatprep.subr.mxu0 0.0
    %342 = vmatpush1.msra.mxu0 %v307
    %343 = vmatprep.subr.mxu0 0.0
    %344 = vmatpush1.msra.mxu0 %v308
    %345 = vmatprep.subr.mxu0 0.0
    %346 = vmatpush1.msra.mxu0 %v309
    %347 = vmatprep.subr.mxu0 0.0
    %348 = vmatpush1.msra.mxu0 %v310
    %349 = vmatprep.subr.mxu0 0.0
    %350 = vmatpush1.msra.mxu0 %v311
    %351 = vmatprep.subr.mxu0 0.0
    %352 = vmatpush1.msra.mxu0 0.0
    %353 = vmatprep.subr.mxu0 0.0
    %354 = vmatpush1.msra.mxu0 0.0
    %355 = vmatprep.subr.mxu0 0.0
    %356 = vmatpush1.msra.mxu0 0.0
    %357 = vmatprep.subr.mxu0 0.0
    %358 = vmatpush1.msra.mxu0 0.0
    %359 = vmatprep.subr.mxu0 0.0
    %360 = vmatpush1.msra.mxu0 0.0
    %361 = vmatprep.subr.mxu0 0.0
    %362 = vmatpush1.msra.mxu0 0.0
    %363 = vmatprep.subr.mxu0 0.0
    %364 = vmatpush1.msra.mxu0 0.0
    %365 = vmatprep.subr.mxu0 0.0
    %366 = vmatpush1.msra.mxu0 0.0
    %367 = vmatprep.subr.mxu0 0.0
    %368 = vmatpush1.msra.mxu0 0.0
    %369 = vmatprep.subr.mxu0 0.0
    %370 = vmatpush1.msra.mxu0 0.0
    %371 = vmatprep.subr.mxu0 0.0
    %372 = vmatpush1.msra.mxu0 0.0
    %373 = vmatprep.subr.mxu0 0.0
    %374 = vmatpush1.msra.mxu0 0.0
    %375 = vmatprep.subr.mxu0 0.0
    %376 = vmatpush1.msra.mxu0 0.0
    %377 = vmatprep.subr.mxu0 0.0
    %378 = vmatpush1.msra.mxu0 0.0
    %379 = vmatprep.subr.mxu0 0.0
    %380 = vmatpush1.msra.mxu0 0.0
    %381 = vmatprep.subr.mxu0 0.0
    %382 = vmatpush1.msra.mxu0 0.0
    %383 = vmatprep.mubr.f32.mxu0 0.0
    %384 = vmatmul.mubr.f32.gmra.mrb[0].mxu0 %v295
    %v385 = vpop.f32.mrb[0].mxu0
    %v386 = vadd.f32 %v317, %v385
    %v387 = vpop.f32.mrb[0].mxu0
    %388 = vdwg.mxu0
    %v389 = vmul.f32 %v386, 0.5
    %v390 = vmul.f32 %v386, 0.70710677
    %v391 = verf.f32.pop %v390
    %v392 = vadd.f32 %v391, 1.0
    %v393 = vmul.f32 %v389, %v392
    %v394 = vld [vmem:[#allocation10] sm:$0xff]
    %v395 = vld [vmem:[#allocation10 + $0x8] sm:$0xff]
    %v396 = vld [vmem:[#allocation10 + $0x10] sm:$0xff]
    %v397 = vld [vmem:[#allocation10 + $0x18] sm:$0xff]
    %v398 = vld [vmem:[#allocation10 + $0x20] sm:$0xff]
    %v399 = vld [vmem:[#allocation10 + $0x28] sm:$0xff]
    %v400 = vld [vmem:[#allocation10 + $0x30] sm:$0xff]
    %v401 = vld [vmem:[#allocation10 + $0x38] sm:$0xff]
    %v402 = vld [vmem:[#allocation10 + $0x40] sm:$0xff]
    %v403 = vld [vmem:[#allocation10 + $0x48] sm:$0xff]
    %v404 = vld [vmem:[#allocation10 + $0x50] sm:$0xff]
    %v405 = vld [vmem:[#allocation10 + $0x58] sm:$0xff]
    %v406 = vld [vmem:[#allocation10 + $0x60] sm:$0xff]
    %v407 = vld [vmem:[#allocation10 + $0x68] sm:$0xff]
    %v408 = vld [vmem:[#allocation10 + $0x70] sm:$0xff]
    %v409 = vld [vmem:[#allocation10 + $0x78] sm:$0xff]
    %v410 = vld [vmem:[%s8] sm:$0x1]
    %v412 = vlaneseq
    %v413 = vshrl.u32 %v412, 7
    %v414 = vsub.s32 0, %v413
    %v415 = vrot.slane %v410, %v414
    %417 = vmatprep.subr.mxu0 0.0
    %418 = vmatpush1.msra.mxu0 %v394
    %419 = vmatprep.subr.mxu0 0.0
    %420 = vmatpush1.msra.mxu0 %v395
    %421 = vmatprep.subr.mxu0 0.0
    %422 = vmatpush1.msra.mxu0 %v396
    %423 = vmatprep.subr.mxu0 0.0
    %424 = vmatpush1.msra.mxu0 %v397
    %425 = vmatprep.subr.mxu0 0.0
    %426 = vmatpush1.msra.mxu0 %v398
    %427 = vmatprep.subr.mxu0 0.0
    %428 = vmatpush1.msra.mxu0 %v399
    %429 = vmatprep.subr.mxu0 0.0
    %430 = vmatpush1.msra.mxu0 %v400
    %431 = vmatprep.subr.mxu0 0.0
    %432 = vmatpush1.msra.mxu0 %v401
    %433 = vmatprep.subr.mxu0 0.0
    %434 = vmatpush1.msra.mxu0 %v402
    %435 = vmatprep.subr.mxu0 0.0
    %436 = vmatpush1.msra.mxu0 %v403
    %437 = vmatprep.subr.mxu0 0.0
    %438 = vmatpush1.msra.mxu0 %v404
    %439 = vmatprep.subr.mxu0 0.0
    %440 = vmatpush1.msra.mxu0 %v405
    %441 = vmatprep.subr.mxu0 0.0
    %442 = vmatpush1.msra.mxu0 %v406
    %443 = vmatprep.subr.mxu0 0.0
    %444 = vmatpush1.msra.mxu0 %v407
    %445 = vmatprep.subr.mxu0 0.0
    %446 = vmatpush1.msra.mxu0 %v408
    %447 = vmatprep.subr.mxu0 0.0
    %448 = vmatpush1.msra.mxu0 %v409
    %449 = vmatprep.subr.mxu0 0.0
    %450 = vmatpush1.msra.mxu0 0.0
    %451 = vmatprep.subr.mxu0 0.0
    %452 = vmatpush1.msra.mxu0 0.0
    %453 = vmatprep.subr.mxu0 0.0
    %454 = vmatpush1.msra.mxu0 0.0
    %455 = vmatprep.subr.mxu0 0.0
    %456 = vmatpush1.msra.mxu0 0.0
    %457 = vmatprep.subr.mxu0 0.0
    %458 = vmatpush1.msra.mxu0 0.0
    %459 = vmatprep.subr.mxu0 0.0
    %460 = vmatpush1.msra.mxu0 0.0
    %461 = vmatprep.subr.mxu0 0.0
    %462 = vmatpush1.msra.mxu0 0.0
    %463 = vmatprep.subr.mxu0 0.0
    %464 = vmatpush1.msra.mxu0 0.0
    %465 = vmatprep.subr.mxu0 0.0
    %466 = vmatpush1.msra.mxu0 0.0
    %467 = vmatprep.subr.mxu0 0.0
    %468 = vmatpush1.msra.mxu0 0.0
    %469 = vmatprep.subr.mxu0 0.0
    %470 = vmatpush1.msra.mxu0 0.0
    %471 = vmatprep.subr.mxu0 0.0
    %472 = vmatpush1.msra.mxu0 0.0
    %473 = vmatprep.subr.mxu0 0.0
    %474 = vmatpush1.msra.mxu0 0.0
    %475 = vmatprep.subr.mxu0 0.0
    %476 = vmatpush1.msra.mxu0 0.0
    %477 = vmatprep.subr.mxu0 0.0
    %478 = vmatpush1.msra.mxu0 0.0
    %479 = vmatprep.subr.mxu0 0.0
    %480 = vmatpush1.msra.mxu0 0.0
    %481 = vmatprep.mubr.f32.mxu0 0.0
    %482 = vmatmul.mubr.f32.gmra.mrb[0].mxu0 %v393
    %v483 = vpop.f32.mrb[0].mxu0
    %v484 = vadd.f32 %v415, %v483
    %v485 = vpop.f32.mrb[0].mxu0
    %486 = vdwg.mxu0
    %487 = vst [vmem:[#allocation11] sm:$0xff] %v484
    // Predicated region
    $region58: #{tpu_custom_call.1} parent=1 // pred_check
      _
    $region59: #{tpu_custom_call.1} parent=1 // pred_check_branch
      %489 = sbr.rel (0) target = $region61
    $region60: #{tpu_custom_call.1} parent=1 // pred_region
      %s491 = ssub.s32 128, 128
      %492 = vsyncadd [#allocation4], %s491
      %s494 = sshll.u32 [#allocation11], 4
      %s495 = int_to_ptr.vmem [resolvable:$true] %s494
      %497 = dma.vmem_to_hbm [thread:$0]  %s495, 128, %s9, [#allocation4]
    $region61: #{tpu_custom_call.1} parent=1 // pred_fallthru
      _
    // Predicated region
    $region62: #{tpu_custom_call.1} parent=1 // pred_check
      _
    $region63: #{tpu_custom_call.1} parent=1 // pred_check_branch
      %499 = sbr.rel (0) target = $region65
    $region64: #{tpu_custom_call.1} parent=1 // pred_region
      %500 = dma.done [#allocation4], 128
    $region65: #{tpu_custom_call.1} parent=1 // pred_fallthru
      _
    %501 = vsyncpa [#allocation3], 1
    %502 = vsyncpa [#allocation6], 1
    %503 = vsyncpa [#allocation9], 1
    %504 = vsyncpa [#allocation4], 1

</llo_original>
